<compile_context>
chip_gen: v7x
topology: tpu7x:2x2x1
jax: 0.10.0
libtpu: 0.0.40
codegen_flags: <defaults>
</compile_context>

<pallas_src>
import jax
import jax.numpy as jnp
from jax.experimental import pallas as pl
from jax.experimental.pallas import tpu as pltpu


def _identity_kernel(x_ref, o_ref):
    # Hot path: straight VMEM load -> store of the current tile.
    o_ref[...] = x_ref[...]


def _vmem_capacity_bytes():
    try:
        return int(pltpu.get_tpu_info().vmem_capacity_bytes)
    except Exception:
        # Conservative default (v7x-sized VMEM).
        return 64 * 1024 * 1024


def comma_model_forward(x, *, min_pallas_bytes=256 * 1024):
    """Identity 'backbone' forward.

    x: (B, C, H, W) array (any dtype).
    returns: array with identical shape/dtype/values.
    """
    total = x.size
    itemsize = jnp.dtype(x.dtype).itemsize
    total_bytes = total * itemsize

    # Identity backbone: for tiny payloads the kernel launch + per-step
    # overhead dominates — just return the input.
    if total == 0 or total_bytes < min_pallas_bytes:
        return x

    # Pick a lane-dense width (multiple of 128) that divides the element count
    # exactly, so the 2-D view is a free reshape and no pad/slice HBM passes
    # are needed.
    lane = 0
    for cand in (1024, 512, 256, 128):
        if total % cand == 0:
            lane = cand
            break
    if lane == 0:
        # Element count not a multiple of 128: the pass-through is already
        # exact; any relayout would add full HBM passes for zero benefit.
        return x

    rows = total // lane
    x2d = x.reshape(rows, lane)  # metadata-only reshape

    # ---- Generation-aware tile / VMEM budget ------------------------------
    if _vmem_capacity_bytes() >= 96 * 1024 * 1024:
        # v5e / v6e class (128 MiB VMEM): bigger tiles, fewer grid steps.
        target_tile_bytes = 8 * 1024 * 1024
        vmem_limit = 64 * 1024 * 1024
    else:
        # v7x class (64 MiB VMEM): keep 2x(in+out) buffers well under budget.
        target_tile_bytes = 4 * 1024 * 1024
        vmem_limit = 32 * 1024 * 1024

    # Sublane packing floor: 8 rows for 32-bit, 16 for 16-bit, 32 for 8-bit.
    min_rows = max(8, 32 // itemsize)

    if rows <= min_rows:
        # Full row extent in one block (full-extent exception to the (8,128)
        # rule) — single grid step, no padding.
        tile_rows = rows
    else:
        # Cap tile size by the VMEM-aware target...
        cap_rows = max(
            min_rows,
            (target_tile_bytes // (lane * itemsize)) // min_rows * min_rows,
        )
        # ...but force >= ~8 grid steps so DMA writeback of block i overlaps
        # prefetch of block i+1 (pure-copy pipelining).
        step_rows = -(-rows // 8)                       # cdiv(rows, 8)
        step_rows = -(-step_rows // min_rows) * min_rows  # round up to packing
        tile_rows = max(min_rows, min(cap_rows, step_rows))

    grid = -(-rows // tile_rows)  # cdiv; partial last block masked by Pallas

    out2d = pl.pallas_call(
        _identity_kernel,
        out_shape=jax.ShapeDtypeStruct((rows, lane), x.dtype),
        grid_spec=pltpu.PrefetchScalarGridSpec(
            num_scalar_prefetch=0,
            grid=(grid,),
            in_specs=[pl.BlockSpec((tile_rows, lane), lambda i: (i, 0))],
            out_specs=pl.BlockSpec((tile_rows, lane), lambda i: (i, 0)),
        ),
        compiler_params=pltpu.CompilerParams(
            dimension_semantics=("parallel",),
            vmem_limit_bytes=int(vmem_limit),
        ),
        cost_estimate=pl.CostEstimate(
            flops=0, transcendentals=0, bytes_accessed=2 * total_bytes
        ),
    )(x2d)

    return out2d.reshape(x.shape)


if __name__ == "__main__":
    key = jax.random.PRNGKey(0)
    k0, k1 = jax.random.split(key)

    # Small NCHW input consistent with a conv-style backbone.
    x = jax.random.normal(k0, (2, 4, 16, 16), dtype=jnp.float32)

    # Default path: tiny input short-circuits (no kernel launch).
    y_fast = jax.block_until_ready(comma_model_forward(x))
    assert y_fast.shape == x.shape and y_fast.dtype == x.dtype
    assert bool(jnp.all(y_fast == x))

    # Force the Pallas copy kernel once on the same small input
    # (single-block, full-extent path).
    y = jax.block_until_ready(comma_model_forward(x, min_pallas_bytes=0))
    assert y.shape == x.shape and y.dtype == x.dtype
    assert bool(jnp.all(y == x))

    # Exercise the multi-step pipelined path on a modest (256 KiB) input.
    x2 = jax.random.normal(k1, (2, 4, 64, 128), dtype=jnp.float32)
    y2 = jax.block_until_ready(comma_model_forward(x2, min_pallas_bytes=0))
    assert y2.shape == x2.shape and y2.dtype == x2.dtype
    assert bool(jnp.all(y2 == x2))

    print("KERNEL_OK")
</pallas_src>

<mosaic_0001>
module attributes {stable_mosaic.version = 11 : i64} {
  func.func @_identity_kernel(%arg0: i32, %arg1: memref<2x1024xf32, #tpu.memory_space<vmem>>, %arg2: memref<2x1024xf32, #tpu.memory_space<vmem>>) attributes {dimension_semantics = [#tpu.dimension_semantics<parallel>], iteration_bounds = array<i64: 1>, scalar_prefetch = 0 : i64, scratch_operands = 0 : i64, tpu.core_type = #tpu.core_type<tc>, window_params = [{transform_indices = @transform_0, window_bounds = array<i64: 2, 1024>}, {transform_indices = @transform_1, window_bounds = array<i64: 2, 1024>}]} {
    %c0 = arith.constant 0 : index
    %c0_0 = arith.constant 0 : index
    %0 = vector.load %arg1[%c0, %c0_0] : memref<2x1024xf32, #tpu.memory_space<vmem>>, vector<2x1024xf32>
    %c0_1 = arith.constant 0 : index
    %c0_2 = arith.constant 0 : index
    %1 = vector.load %arg2[%c0_1, %c0_2] : memref<2x1024xf32, #tpu.memory_space<vmem>>, vector<2x1024xf32>
    tpu.vector_store %arg2[%c0_1, %c0_2], %0 {strides = array<i32>} : memref<2x1024xf32, #tpu.memory_space<vmem>>, vector<2x1024xf32>,
    return
  }
  func.func @transform_0(%arg0: i32) -> (i32, i32) {
    %c0_i32 = arith.constant 0 : i32
    %c0_i32_0 = arith.constant 0 : i32
    return %arg0, %c0_i32 : i32, i32
  }
  func.func @transform_1(%arg0: i32) -> (i32, i32) {
    %c0_i32 = arith.constant 0 : i32
    %c0_i32_0 = arith.constant 0 : i32
    return %arg0, %c0_i32 : i32, i32
  }
}

</mosaic_0001>

<llo_original>
// kernel: tpu_custom_call.1
$region0: #{tpu_custom_call.1}
  #allocation0 [shape = 'u32[]', space=smem, size = 0x4, offset = 0x4, fixed_abs, tag = 'smem constant byte address 0x4 - core index']
  #allocation1 [shape = 'u32[144,128]{1,0:T(1,128)}', space=vmem, size = 0x12000, scoped, tag = 'internal scratch']
  %s0 = inlined_call_operand.hbm [shape: f32[2,1024], index: 0, kind: input, shape index: {}]
  %s1 = inlined_call_operand.hbm [shape: f32[2,1024], index: 1, kind: output, shape index: {}]
  %s2 = sld [smem:[#allocation0]]
  $region18: #{tpu_custom_call.1} parent=0
    _
  %s4 = ssub.s32 1, %s2
  %s5 = scalar_select 0, %s4, %s2
  $region1: #{tpu_custom_call.1} parent=0
    #allocation2 [shape = 'u8[8192]{0}', space=vmem, size = 0x2000, scoped, tag = 'input window, operand 0, single buffered']
    #allocation3 [shape = 's32[1]{0}', space=sflag, size = 0x4, scoped, tag = 'scoped memory for tpu_custom_call.1']
    #allocation4 [shape = 's32[1]{0}', space=sflag, size = 0x4, scoped, tag = 'scoped memory for tpu_custom_call.1']
    #allocation5 [shape = 'u8[8192]{0}', space=vmem, size = 0x2000, scoped, tag = 'output window, operand 0, single buffered']
    %6 = vsyncpa [#allocation3], 0
    %7 = vsyncpa [#allocation4], 0
    // Predicated region
    $region2: #{tpu_custom_call.1} parent=1 // pred_check
      _
    $region3: #{tpu_custom_call.1} parent=1 // pred_check_branch
      %9 = sbr.rel (0) target = $region5
    $region4: #{tpu_custom_call.1} parent=1 // pred_region
      %s11 = ssub.s32 256, 256
      %12 = vsyncadd [#allocation3], %s11
      %s14 = sshll.u32 [#allocation2], 4
      %s15 = int_to_ptr.vmem [resolvable:$true] %s14
      %17 = dma.hbm_to_vmem [thread:$0]  %s0, 256, %s15, [#allocation3]
    $region5: #{tpu_custom_call.1} parent=1 // pred_fallthru
      _
    // Predicated region
    $region6: #{tpu_custom_call.1} parent=1 // pred_check
      _
    $region7: #{tpu_custom_call.1} parent=1 // pred_check_branch
      %19 = sbr.rel (0) target = $region9
    $region8: #{tpu_custom_call.1} parent=1 // pred_region
      %20 = dma.done [#allocation3], 256
    $region9: #{tpu_custom_call.1} parent=1 // pred_fallthru
      _
    %v21 = vld [vmem:[#allocation2] sm:$0xff]
    %v22 = vld [vmem:[#allocation2 + $0x8] sm:$0xff]
    %23 = vst [vmem:[#allocation5] sm:$0xff] %v21
    %24 = vst [vmem:[#allocation5 + $0x8] sm:$0xff] %v22
    // Predicated region
    $region10: #{tpu_custom_call.1} parent=1 // pred_check
      _
    $region11: #{tpu_custom_call.1} parent=1 // pred_check_branch
      %26 = sbr.rel (0) target = $region13
    $region12: #{tpu_custom_call.1} parent=1 // pred_region
      %s28 = ssub.s32 256, 256
      %29 = vsyncadd [#allocation4], %s28
      %s31 = sshll.u32 [#allocation5], 4
      %s32 = int_to_ptr.vmem [resolvable:$true] %s31
      %34 = dma.vmem_to_hbm [thread:$0]  %s32, 256, %s1, [#allocation4]
    $region13: #{tpu_custom_call.1} parent=1 // pred_fallthru
      _
    // Predicated region
    $region14: #{tpu_custom_call.1} parent=1 // pred_check
      _
    $region15: #{tpu_custom_call.1} parent=1 // pred_check_branch
      %36 = sbr.rel (0) target = $region17
    $region16: #{tpu_custom_call.1} parent=1 // pred_region
      %37 = dma.done [#allocation4], 256
    $region17: #{tpu_custom_call.1} parent=1 // pred_fallthru
      _
    %38 = vsyncpa [#allocation3], 1
    %39 = vsyncpa [#allocation4], 1

</llo_original>
